<compile_context>
chip_gen: v7x
topology: tpu7x:2x2x1
jax: 0.10.0
libtpu: 0.0.40
codegen_flags: <defaults>
</compile_context>

<pallas_src>
import functools

import jax
import jax.numpy as jnp
from jax.experimental import pallas as pl
from jax.experimental.pallas import tpu as pltpu

HIDDEN_STATE = 256

# Conservative per-row live f32 activation footprint inside the kernel:
# y (512 f32) + h2/g2 (2 x 256 f32) + bf16 casts + headroom  ~ 6 KB/row.
_ROW_VMEM_BYTES = 6 * 1024
_MAX_BLOCK_ROWS = 1024          # stays under v5e's 16 MiB scoped-VMEM default


def _critic_kernel(s_ref, a_ref,
                   w14s_ref, w14a_ref, b14_ref,
                   w2_ref, b2_ref, w5_ref, b5_ref,
                   w3_ref, w6_ref, b36_ref,
                   q_ref, *, compute_dtype=jnp.bfloat16):
    s = s_ref[...].astype(compute_dtype)
    a = a_ref[...].astype(compute_dtype)

    # --- fused layer 1 for both heads: one 512-wide MXU pass, no sa concat ---
    # (kept as two tiny-K dots to avoid a wrapper-level concat; layer-2 dots
    #  dominate the MXU, so re-fusing K would only matter if layer 1 showed up
    #  on the critical path in a bundle dump.)
    y = (jnp.dot(s, w14s_ref[...], preferred_element_type=jnp.float32)
         + jnp.dot(a, w14a_ref[...], preferred_element_type=jnp.float32)
         + b14_ref[...])
    y = jnp.maximum(y, 0.0)

    # lane-256-aligned slices -> tile aligned, free
    h = y[:, :HIDDEN_STATE].astype(compute_dtype)   # Q1 hidden
    g = y[:, HIDDEN_STATE:].astype(compute_dtype)   # Q2 hidden

    # --- layer 2: two independent 256x256 dots, issued back-to-back ---
    h2 = jnp.maximum(
        jnp.dot(h, w2_ref[...], preferred_element_type=jnp.float32) + b2_ref[...],
        0.0)
    g2 = jnp.maximum(
        jnp.dot(g, w5_ref[...], preferred_element_type=jnp.float32) + b5_ref[...],
        0.0)

    # --- layer 3: N=1 matmuls replaced by VPU multiply + XLU lane reduce ---
    q1 = jnp.sum(h2 * w3_ref[...], axis=-1, keepdims=True) + b36_ref[0, 0]
    q2 = jnp.sum(g2 * w6_ref[...], axis=-1, keepdims=True) + b36_ref[0, 1]

    # merged (B, 2) output written with a single store (col 0 = q1, col 1 = q2)
    q_ref[...] = jnp.concatenate([q1, q2], axis=1).astype(q_ref.dtype)


def prepare_critic_params(params, state_dim, compute_dtype=jnp.bfloat16):
    """One-time (outside-kernel) fusion / pre-split / cast of the parameters."""
    w14 = jnp.concatenate([params["w1"], params["w4"]], axis=1)   # (in_dim, 512)
    b14 = jnp.concatenate([params["b1"], params["b4"]], axis=1)   # (1, 512)
    b36 = jnp.concatenate([params["b3"], params["b6"]], axis=1)   # (1, 2)
    return {
        "w14_s": w14[:state_dim].astype(compute_dtype),           # (state_dim, 512)
        "w14_a": w14[state_dim:].astype(compute_dtype),           # (action_dim, 512)
        "b14": b14.astype(jnp.float32),
        "w2": params["w2"].astype(compute_dtype),                 # (256, 256)
        "b2": params["b2"].astype(jnp.float32),                   # (1, 256)
        "w5": params["w5"].astype(compute_dtype),
        "b5": params["b5"].astype(jnp.float32),
        "w3_row": params["w3"].T.astype(jnp.float32),             # (1, 256)  f32
        "w6_row": params["w6"].T.astype(jnp.float32),             # (1, 256)  f32
        "b36": b36.astype(jnp.float32),                           # (1, 2)  SMEM
    }


def _num_tensorcores_per_chip():
    """Conservative TC-count detection: grid only pays off on megacore (v7x)."""
    try:
        kind = getattr(jax.devices()[0], "device_kind", "").lower()
    except Exception:
        return 1
    return 2 if "v7" in kind else 1


def _largest_block(rows, max_rows):
    for bb in range(min(max_rows, rows), 7, -8):
        if rows % bb == 0:
            return bb
    return None


def _choose_block_b(B):
    """None -> gridless. Otherwise a block size (multiple of 8, divides B)."""
    ntc = _num_tensorcores_per_chip()
    if ntc >= 2 and B >= 16 and B % 16 == 0:
        half = B // 2
        if half <= _MAX_BLOCK_ROWS:
            return half                         # nb == 2: one block per TC
        bb = _largest_block(half, _MAX_BLOCK_ROWS)
        if bb is not None:
            return bb
    if B <= _MAX_BLOCK_ROWS:
        return None                             # single TC / small batch: gridless
    if B % 8 == 0:
        return _largest_block(B, _MAX_BLOCK_ROWS)
    return None                                 # ragged big batch: gridless + VMEM bump


def _vmem_limit_bytes(block_rows, weight_bytes):
    est = weight_bytes + block_rows * _ROW_VMEM_BYTES + (1 << 20)
    if est <= 12 << 20:
        return None                             # comfortably under every default
    return int(min(48 << 20, 2 * est))          # stays under v7x's 64 MiB physical


def critic_forward(state, action, prep, *, block_b="auto"):
    """Pallas equivalent of Critic.forward(state, action) -> (q1, q2)."""
    B, state_dim = state.shape
    action_dim = action.shape[1]
    in_dim = state_dim + action_dim
    compute_dtype = prep["w2"].dtype

    flat = [state, action,
            prep["w14_s"], prep["w14_a"], prep["b14"],
            prep["w2"], prep["b2"], prep["w5"], prep["b5"],
            prep["w3_row"], prep["w6_row"], prep["b36"]]

    kernel = functools.partial(_critic_kernel, compute_dtype=compute_dtype)
    out_shape = jax.ShapeDtypeStruct((B, 2), jnp.float32)

    flops = (2 * B * in_dim * (2 * HIDDEN_STATE)          # fused layer 1
             + 2 * (2 * B * HIDDEN_STATE * HIDDEN_STATE)  # two layer-2 dots
             + 2 * (2 * B * HIDDEN_STATE))                # two lane reductions
    weight_bytes = int(sum(int(x.size) * x.dtype.itemsize for x in flat[2:]))
    bytes_accessed = int(weight_bytes
                         + sum(int(x.size) * x.dtype.itemsize for x in flat[:2])
                         + B * 2 * 4)
    cost = pl.CostEstimate(flops=int(flops), transcendentals=0,
                           bytes_accessed=bytes_accessed)

    if block_b == "auto":
        block_b = _choose_block_b(B)
    use_grid = (block_b is not None) and (block_b < B)

    if use_grid:
        # Batch-parallel grid: on v7x nb==2 puts exactly one block per TC.
        assert B % block_b == 0 and block_b % 8 == 0, \
            "block_b must divide the batch and be a multiple of 8"
        nb = B // block_b
        vmem_limit = _vmem_limit_bytes(block_b, weight_bytes)

        def full_block(x):
            return pl.BlockSpec(x.shape, lambda i, _nd=x.ndim: (0,) * _nd)

        in_specs = [
            pl.BlockSpec((block_b, state_dim), lambda i: (i, 0)),
            pl.BlockSpec((block_b, action_dim), lambda i: (i, 0)),
            full_block(prep["w14_s"]), full_block(prep["w14_a"]),
            full_block(prep["b14"]),
            full_block(prep["w2"]), full_block(prep["b2"]),
            full_block(prep["w5"]), full_block(prep["b5"]),
            full_block(prep["w3_row"]), full_block(prep["w6_row"]),
            pl.BlockSpec((1, 2), lambda i: (0, 0), memory_space=pltpu.SMEM),
        ]
        out_specs = pl.BlockSpec((block_b, 2), lambda i: (i, 0))
        q = pl.pallas_call(
            kernel,
            out_shape=out_shape,
            grid=(nb,),
            in_specs=in_specs,
            out_specs=out_specs,
            compiler_params=pltpu.CompilerParams(
                dimension_semantics=("parallel",),
                vmem_limit_bytes=vmem_limit),
            cost_estimate=cost,
        )(*flat)
    else:
        # Single-TC / small problem: everything fits in VMEM, keep it gridless.
        vmem_limit = _vmem_limit_bytes(B, weight_bytes)
        in_specs = ([pl.BlockSpec(memory_space=pltpu.VMEM)] * 11
                    + [pl.BlockSpec(memory_space=pltpu.SMEM)])
        q = pl.pallas_call(
            kernel,
            out_shape=out_shape,
            in_specs=in_specs,
            out_specs=pl.BlockSpec(memory_space=pltpu.VMEM),
            compiler_params=pltpu.CompilerParams(vmem_limit_bytes=vmem_limit),
            cost_estimate=cost,
        )(*flat)

    return q[:, 0:1], q[:, 1:2]


def init_critic_params(key, state_dim, action_dim):
    """Deterministic init mirroring nn.Linear default (uniform(+-1/sqrt(fan_in)))."""
    in_dim = state_dim + action_dim
    dims = [
        ("w1", (in_dim, HIDDEN_STATE)), ("b1", (1, HIDDEN_STATE)),
        ("w2", (HIDDEN_STATE, HIDDEN_STATE)), ("b2", (1, HIDDEN_STATE)),
        ("w3", (HIDDEN_STATE, 1)), ("b3", (1, 1)),
        ("w4", (in_dim, HIDDEN_STATE)), ("b4", (1, HIDDEN_STATE)),
        ("w5", (HIDDEN_STATE, HIDDEN_STATE)), ("b5", (1, HIDDEN_STATE)),
        ("w6", (HIDDEN_STATE, 1)), ("b6", (1, 1)),
    ]
    params = {}
    keys = jax.random.split(key, len(dims))
    dims_map = dict(dims)
    for k, (name, shape) in zip(keys, dims):
        if name.startswith("w"):
            bound = 1.0 / jnp.sqrt(shape[0])
        else:
            bound = 1.0 / jnp.sqrt(dims_map["w" + name[1:]][0])
        params[name] = jax.random.uniform(
            k, shape, dtype=jnp.float32, minval=-bound, maxval=bound)
    return params


def _reference_forward(state, action, p):
    sa = jnp.concatenate([state, action], axis=1)
    h = jax.nn.relu(sa @ p["w1"] + p["b1"])
    h = jax.nn.relu(h @ p["w2"] + p["b2"])
    q1 = h @ p["w3"] + p["b3"]
    g = jax.nn.relu(sa @ p["w4"] + p["b4"])
    g = jax.nn.relu(g @ p["w5"] + p["b5"])
    q2 = g @ p["w6"] + p["b6"]
    return q1, q2


if __name__ == "__main__":
    key = jax.random.PRNGKey(0)
    k_state, k_action, k_params, k_state2, k_action2 = jax.random.split(key, 5)

    state_dim = 16
    action_dim = 4
    params = init_critic_params(k_params, state_dim, action_dim)

    # --- small batch, f32 weights (exactness check), gridless path ---
    batch = 8
    state = jax.random.normal(k_state, (batch, state_dim), dtype=jnp.float32)
    action = jax.random.normal(k_action, (batch, action_dim), dtype=jnp.float32)

    prep_f32 = prepare_critic_params(params, state_dim, jnp.float32)
    q1, q2 = critic_forward(state, action, prep_f32)
    q1 = jax.block_until_ready(q1)
    q2 = jax.block_until_ready(q2)

    r1, r2 = _reference_forward(state, action, params)
    assert q1.shape == (batch, 1) and q2.shape == (batch, 1)
    assert jnp.allclose(q1, r1, atol=1e-4, rtol=1e-4)
    assert jnp.allclose(q2, r2, atol=1e-4, rtol=1e-4)

    # --- large batch, default bf16 weights, auto block selection -------------
    # (gridless on single-TC v5e/v6e; nb=2 batch-parallel grid on v7x)
    batch2 = 512
    state2 = jax.random.normal(k_state2, (batch2, state_dim), dtype=jnp.float32)
    action2 = jax.random.normal(k_action2, (batch2, action_dim), dtype=jnp.float32)

    prep_bf16 = prepare_critic_params(params, state_dim)   # bf16 default
    q1b, q2b = critic_forward(state2, action2, prep_bf16, block_b="auto")
    q1b = jax.block_until_ready(q1b)
    q2b = jax.block_until_ready(q2b)

    r1b, r2b = _reference_forward(state2, action2, params)
    assert q1b.shape == (batch2, 1) and q2b.shape == (batch2, 1)
    assert jnp.allclose(q1b, r1b, atol=5e-2, rtol=5e-2)
    assert jnp.allclose(q2b, r2b, atol=5e-2, rtol=5e-2)

    # --- explicitly exercise the gridded (multi-block) code path -------------
    q1c, q2c = critic_forward(state2, action2, prep_bf16, block_b=256)
    q1c = jax.block_until_ready(q1c)
    q2c = jax.block_until_ready(q2c)
    assert jnp.allclose(q1c, r1b, atol=5e-2, rtol=5e-2)
    assert jnp.allclose(q2c, r2b, atol=5e-2, rtol=5e-2)

    print("KERNEL_OK")
</pallas_src>

<mosaic_0001>
module attributes {stable_mosaic.version = 11 : i64} {
  func.func @_critic_kernel(%arg0: memref<8x16xf32, #tpu.memory_space<vmem>>, %arg1: memref<8x4xf32, #tpu.memory_space<vmem>>, %arg2: memref<16x512xf32, #tpu.memory_space<vmem>>, %arg3: memref<4x512xf32, #tpu.memory_space<vmem>>, %arg4: memref<1x512xf32, #tpu.memory_space<vmem>>, %arg5: memref<256x256xf32, #tpu.memory_space<vmem>>, %arg6: memref<1x256xf32, #tpu.memory_space<vmem>>, %arg7: memref<256x256xf32, #tpu.memory_space<vmem>>, %arg8: memref<1x256xf32, #tpu.memory_space<vmem>>, %arg9: memref<1x256xf32, #tpu.memory_space<vmem>>, %arg10: memref<1x256xf32, #tpu.memory_space<vmem>>, %arg11: memref<1x2xf32, #tpu.memory_space<smem>>, %arg12: memref<8x2xf32, #tpu.memory_space<vmem>>) attributes {dimension_semantics = [], scalar_prefetch = 0 : i64, scratch_operands = 0 : i64, tpu.core_type = #tpu.core_type<tc>} {
    %c0 = arith.constant 0 : index
    %c0_0 = arith.constant 0 : index
    %0 = vector.load %arg0[%c0, %c0_0] : memref<8x16xf32, #tpu.memory_space<vmem>>, vector<8x16xf32>
    %c0_1 = arith.constant 0 : index
    %c0_2 = arith.constant 0 : index
    %1 = vector.load %arg1[%c0_1, %c0_2] : memref<8x4xf32, #tpu.memory_space<vmem>>, vector<8x4xf32>
    %c0_3 = arith.constant 0 : index
    %c0_4 = arith.constant 0 : index
    %2 = vector.load %arg2[%c0_3, %c0_4] : memref<16x512xf32, #tpu.memory_space<vmem>>, vector<16x512xf32>
    %cst = arith.constant dense<0.000000e+00> : vector<8x512xf32>
    %3 = tpu.matmul %0, %2, %cst {dimension_numbers = #tpu.dot_dimension_numbers<[1], [0], [0], [1], [0, 0, 1, 1], [], []>} : vector<8x16xf32>, vector<16x512xf32>, vector<8x512xf32> -> vector<8x512xf32>
    %c0_5 = arith.constant 0 : index
    %c0_6 = arith.constant 0 : index
    %4 = vector.load %arg3[%c0_5, %c0_6] : memref<4x512xf32, #tpu.memory_space<vmem>>, vector<4x512xf32>
    %cst_7 = arith.constant dense<0.000000e+00> : vector<8x512xf32>
    %5 = tpu.matmul %1, %4, %cst_7 {dimension_numbers = #tpu.dot_dimension_numbers<[1], [0], [0], [1], [0, 0, 1, 1], [], []>} : vector<8x4xf32>, vector<4x512xf32>, vector<8x512xf32> -> vector<8x512xf32>
    %6 = arith.addf %3, %5 : vector<8x512xf32>
    %c0_8 = arith.constant 0 : index
    %c0_9 = arith.constant 0 : index
    %7 = vector.load %arg4[%c0_8, %c0_9] : memref<1x512xf32, #tpu.memory_space<vmem>>, vector<1x512xf32>
    %8 = vector.broadcast %7 : vector<1x512xf32> to vector<8x512xf32>
    %9 = arith.addf %6, %8 : vector<8x512xf32>
    %cst_10 = arith.constant 0.000000e+00 : f32
    %10 = vector.broadcast %cst_10 : f32 to vector<8x512xf32>
    %11 = arith.maximumf %9, %10 : vector<8x512xf32>
    %12 = vector.extract_strided_slice %11 {offsets = [0, 0], sizes = [8, 256], strides = [1, 1]} : vector<8x512xf32> to vector<8x256xf32>
    %13 = vector.extract_strided_slice %11 {offsets = [0, 256], sizes = [8, 256], strides = [1, 1]} : vector<8x512xf32> to vector<8x256xf32>
    %c0_11 = arith.constant 0 : index
    %c0_12 = arith.constant 0 : index
    %14 = vector.load %arg5[%c0_11, %c0_12] : memref<256x256xf32, #tpu.memory_space<vmem>>, vector<256x256xf32>
    %cst_13 = arith.constant dense<0.000000e+00> : vector<8x256xf32>
    %15 = tpu.matmul %12, %14, %cst_13 {dimension_numbers = #tpu.dot_dimension_numbers<[1], [0], [0], [1], [0, 0, 1, 1], [], []>} : vector<8x256xf32>, vector<256x256xf32>, vector<8x256xf32> -> vector<8x256xf32>
    %c0_14 = arith.constant 0 : index
    %c0_15 = arith.constant 0 : index
    %16 = vector.load %arg6[%c0_14, %c0_15] : memref<1x256xf32, #tpu.memory_space<vmem>>, vector<1x256xf32>
    %17 = vector.broadcast %16 : vector<1x256xf32> to vector<8x256xf32>
    %18 = arith.addf %15, %17 : vector<8x256xf32>
    %cst_16 = arith.constant 0.000000e+00 : f32
    %19 = vector.broadcast %cst_16 : f32 to vector<8x256xf32>
    %20 = arith.maximumf %18, %19 : vector<8x256xf32>
    %c0_17 = arith.constant 0 : index
    %c0_18 = arith.constant 0 : index
    %21 = vector.load %arg7[%c0_17, %c0_18] : memref<256x256xf32, #tpu.memory_space<vmem>>, vector<256x256xf32>
    %cst_19 = arith.constant dense<0.000000e+00> : vector<8x256xf32>
    %22 = tpu.matmul %13, %21, %cst_19 {dimension_numbers = #tpu.dot_dimension_numbers<[1], [0], [0], [1], [0, 0, 1, 1], [], []>} : vector<8x256xf32>, vector<256x256xf32>, vector<8x256xf32> -> vector<8x256xf32>
    %c0_20 = arith.constant 0 : index
    %c0_21 = arith.constant 0 : index
    %23 = vector.load %arg8[%c0_20, %c0_21] : memref<1x256xf32, #tpu.memory_space<vmem>>, vector<1x256xf32>
    %24 = vector.broadcast %23 : vector<1x256xf32> to vector<8x256xf32>
    %25 = arith.addf %22, %24 : vector<8x256xf32>
    %cst_22 = arith.constant 0.000000e+00 : f32
    %26 = vector.broadcast %cst_22 : f32 to vector<8x256xf32>
    %27 = arith.maximumf %25, %26 : vector<8x256xf32>
    %c0_23 = arith.constant 0 : index
    %c0_24 = arith.constant 0 : index
    %28 = vector.load %arg9[%c0_23, %c0_24] : memref<1x256xf32, #tpu.memory_space<vmem>>, vector<1x256xf32>
    %29 = vector.broadcast %28 : vector<1x256xf32> to vector<8x256xf32>
    %30 = arith.mulf %20, %29 : vector<8x256xf32>
    %cst_25 = arith.constant dense<0.000000e+00> : vector<8xf32>
    %31 = vector.multi_reduction <add>, %30, %cst_25 [1] : vector<8x256xf32> to vector<8xf32>
    %32 = vector.shape_cast %31 : vector<8xf32> to vector<8x1xf32>
    %c0_26 = arith.constant 0 : index
    %c0_27 = arith.constant 0 : index
    %33 = memref.load %arg11[%c0_26, %c0_27] : memref<1x2xf32, #tpu.memory_space<smem>>
    %34 = vector.broadcast %33 : f32 to vector<8x1xf32>
    %35 = arith.addf %32, %34 : vector<8x1xf32>
    %c0_28 = arith.constant 0 : index
    %c0_29 = arith.constant 0 : index
    %36 = vector.load %arg10[%c0_28, %c0_29] : memref<1x256xf32, #tpu.memory_space<vmem>>, vector<1x256xf32>
    %37 = vector.broadcast %36 : vector<1x256xf32> to vector<8x256xf32>
    %38 = arith.mulf %27, %37 : vector<8x256xf32>
    %cst_30 = arith.constant dense<0.000000e+00> : vector<8xf32>
    %39 = vector.multi_reduction <add>, %38, %cst_30 [1] : vector<8x256xf32> to vector<8xf32>
    %40 = vector.shape_cast %39 : vector<8xf32> to vector<8x1xf32>
    %c0_31 = arith.constant 0 : index
    %c1 = arith.constant 1 : index
    %41 = memref.load %arg11[%c0_31, %c1] : memref<1x2xf32, #tpu.memory_space<smem>>
    %42 = vector.broadcast %41 : f32 to vector<8x1xf32>
    %43 = arith.addf %40, %42 : vector<8x1xf32>
    %44 = tpu.concatenate %35, %43 in 1 : vector<8x1xf32>, vector<8x1xf32> -> vector<8x2xf32>
    %c0_32 = arith.constant 0 : index
    %c0_33 = arith.constant 0 : index
    %45 = vector.load %arg12[%c0_32, %c0_33] : memref<8x2xf32, #tpu.memory_space<vmem>>, vector<8x2xf32>
    tpu.vector_store %arg12[%c0_32, %c0_33], %44 {strides = array<i32>} : memref<8x2xf32, #tpu.memory_space<vmem>>, vector<8x2xf32>,
    return
  }
}

</mosaic_0001>

<llo_original>
// kernel: tpu_custom_call.1
$region0: #{tpu_custom_call.1}
  #allocation0 [shape = 'u32[]', space=smem, size = 0x4, offset = 0x4, fixed_abs, tag = 'smem constant byte address 0x4 - core index']
  #allocation1 [shape = 'u32[144,128]{1,0:T(1,128)}', space=vmem, size = 0x12000, scoped, tag = 'internal scratch']
  %s0 = inlined_call_operand.hbm [shape: f32[8,16], index: 0, kind: input, shape index: {}]
  %s1 = inlined_call_operand.vmem [shape: f32[8,4], index: 1, kind: input, shape index: {}]
  %s2 = inlined_call_operand.hbm [shape: f32[16,512], index: 2, kind: input, shape index: {}]
  %s3 = inlined_call_operand.vmem [shape: f32[4,512], index: 3, kind: input, shape index: {}]
  %s4 = inlined_call_operand.vmem [shape: f32[1,512], index: 4, kind: input, shape index: {}]
  %s5 = inlined_call_operand.hbm [shape: f32[256,256], index: 5, kind: input, shape index: {}]
  %s6 = inlined_call_operand.vmem [shape: f32[1,256], index: 6, kind: input, shape index: {}]
  %s7 = inlined_call_operand.hbm [shape: f32[256,256], index: 7, kind: input, shape index: {}]
  %s8 = inlined_call_operand.vmem [shape: f32[1,256], index: 8, kind: input, shape index: {}]
  %s9 = inlined_call_operand.vmem [shape: f32[1,256], index: 9, kind: input, shape index: {}]
  %s10 = inlined_call_operand.vmem [shape: f32[1,256], index: 10, kind: input, shape index: {}]
  %s11 = inlined_call_operand.vmem [shape: f32[1,2], index: 11, kind: input, shape index: {}]
  %s12 = inlined_call_operand.vmem [shape: f32[8,2], index: 12, kind: output, shape index: {}]
  %s13 = sld [smem:[#allocation0]]
  $region78: #{tpu_custom_call.1} parent=0
    _
  %s15 = ssub.s32 1, %s13
  %s16 = scalar_select 0, %s15, %s13
  $region1: #{tpu_custom_call.1} parent=0
    #allocation2 [shape = 'u8[4096]{0}', space=vmem, size = 0x1000, scoped, tag = 'input window, operand 0, single buffered']
    #allocation3 [shape = 's32[1]{0}', space=sflag, size = 0x4, scoped, tag = 'scoped memory for tpu_custom_call.1']
    #allocation4 [shape = 's32[1]{0}', space=sflag, size = 0x4, scoped, tag = 'scoped memory for tpu_custom_call.1']
    #allocation5 [shape = 'u8[32768]{0}', space=vmem, size = 0x8000, scoped, tag = 'input window, operand 2, single buffered']
    #allocation6 [shape = 's32[1]{0}', space=sflag, size = 0x4, scoped, tag = 'scoped memory for tpu_custom_call.1']
    #allocation7 [shape = 'u8[262144]{0}', space=vmem, size = 0x40000, scoped, tag = 'input window, operand 5, single buffered']
    #allocation8 [shape = 'u8[262144]{0}', space=vmem, size = 0x40000, scoped, tag = 'input window, operand 7, single buffered']
    #allocation9 [shape = 's32[1]{0}', space=sflag, size = 0x4, scoped, tag = 'scoped memory for tpu_custom_call.1']
    #allocation10 [shape = 'u8[512]{0}', space=smem, size = 0x200, scoped, tag = 'input window, operand 11, single buffered']
    %17 = vsyncpa [#allocation3], 0
    %18 = vsyncpa [#allocation6], 0
    %19 = vsyncpa [#allocation9], 0
    %20 = vsyncpa [#allocation4], 0
    // Predicated region
    $region2: #{tpu_custom_call.1} parent=1 // pred_check
      _
    $region3: #{tpu_custom_call.1} parent=1 // pred_check_branch
      %22 = sbr.rel (0) target = $region5
    $region4: #{tpu_custom_call.1} parent=1 // pred_region
      %s24 = ssub.s32 128, 128
      %25 = vsyncadd [#allocation3], %s24
      %s27 = sshll.u32 [#allocation2], 4
      %s28 = int_to_ptr.vmem [resolvable:$true] %s27
      %30 = dma.hbm_to_vmem [thread:$0]  %s0, 128, %s28, [#allocation3]
    $region5: #{tpu_custom_call.1} parent=1 // pred_fallthru
      _
    // Predicated region
    $region6: #{tpu_custom_call.1} parent=1 // pred_check
      _
    $region7: #{tpu_custom_call.1} parent=1 // pred_check_branch
      %32 = sbr.rel (0) target = $region9
    $region8: #{tpu_custom_call.1} parent=1 // pred_region
      _
    $region9: #{tpu_custom_call.1} parent=1 // pred_fallthru
      _
    // Predicated region
    $region10: #{tpu_custom_call.1} parent=1 // pred_check
      _
    $region11: #{tpu_custom_call.1} parent=1 // pred_check_branch
      %34 = sbr.rel (0) target = $region13
    $region12: #{tpu_custom_call.1} parent=1 // pred_region
      %s36 = ssub.s32 1024, 1024
      %37 = vsyncadd [#allocation6], %s36
      %s38 = sshll.u32 [#allocation5], 4
      %s39 = int_to_ptr.vmem [resolvable:$true] %s38
      %44 = dma.hbm_to_vmem [thread:$0]  %s2, 1024, %s39, [#allocation6], 512, 512, 32
    $region13: #{tpu_custom_call.1} parent=1 // pred_fallthru
      _
    // Predicated region
    $region14: #{tpu_custom_call.1} parent=1 // pred_check
      _
    $region15: #{tpu_custom_call.1} parent=1 // pred_check_branch
      %46 = sbr.rel (0) target = $region17
    $region16: #{tpu_custom_call.1} parent=1 // pred_region
      _
    $region17: #{tpu_custom_call.1} parent=1 // pred_fallthru
      _
    // Predicated region
    $region18: #{tpu_custom_call.1} parent=1 // pred_check
      _
    $region19: #{tpu_custom_call.1} parent=1 // pred_check_branch
      %48 = sbr.rel (0) target = $region21
    $region20: #{tpu_custom_call.1} parent=1 // pred_region
      _
    $region21: #{tpu_custom_call.1} parent=1 // pred_fallthru
      _
    // Predicated region
    $region22: #{tpu_custom_call.1} parent=1 // pred_check
      _
    $region23: #{tpu_custom_call.1} parent=1 // pred_check_branch
      %50 = sbr.rel (0) target = $region25
    $region24: #{tpu_custom_call.1} parent=1 // pred_region
      %s52 = ssub.s32 8192, 8192
      %53 = vsyncadd [#allocation6], %s52
      %s54 = sshll.u32 [#allocation7], 4
      %s55 = int_to_ptr.vmem [resolvable:$true] %s54
      %60 = dma.hbm_to_vmem [thread:$0]  %s5, 8192, %s55, [#allocation6], 256, 256, 16
    $region25: #{tpu_custom_call.1} parent=1 // pred_fallthru
      _
    // Predicated region
    $region26: #{tpu_custom_call.1} parent=1 // pred_check
      _
    $region27: #{tpu_custom_call.1} parent=1 // pred_check_branch
      %62 = sbr.rel (0) target = $region29
    $region28: #{tpu_custom_call.1} parent=1 // pred_region
      _
    $region29: #{tpu_custom_call.1} parent=1 // pred_fallthru
      _
    // Predicated region
    $region30: #{tpu_custom_call.1} parent=1 // pred_check
      _
    $region31: #{tpu_custom_call.1} parent=1 // pred_check_branch
      %64 = sbr.rel (0) target = $region33
    $region32: #{tpu_custom_call.1} parent=1 // pred_region
      %s66 = ssub.s32 8192, 8192
      %67 = vsyncadd [#allocation9], %s66
      %s68 = sshll.u32 [#allocation8], 4
      %s69 = int_to_ptr.vmem [resolvable:$true] %s68
      %74 = dma.hbm_to_vmem [thread:$0]  %s7, 8192, %s69, [#allocation9], 256, 256, 16
    $region33: #{tpu_custom_call.1} parent=1 // pred_fallthru
      _
    // Predicated region
    $region34: #{tpu_custom_call.1} parent=1 // pred_check
      _
    $region35: #{tpu_custom_call.1} parent=1 // pred_check_branch
      %76 = sbr.rel (0) target = $region37
    $region36: #{tpu_custom_call.1} parent=1 // pred_region
      _
    $region37: #{tpu_custom_call.1} parent=1 // pred_fallthru
      _
    // Predicated region
    $region38: #{tpu_custom_call.1} parent=1 // pred_check
      _
    $region39: #{tpu_custom_call.1} parent=1 // pred_check_branch
      %78 = sbr.rel (0) target = $region41
    $region40: #{tpu_custom_call.1} parent=1 // pred_region
      _
    $region41: #{tpu_custom_call.1} parent=1 // pred_fallthru
      _
    // Predicated region
    $region42: #{tpu_custom_call.1} parent=1 // pred_check
      _
    $region43: #{tpu_custom_call.1} parent=1 // pred_check_branch
      %80 = sbr.rel (0) target = $region45
    $region44: #{tpu_custom_call.1} parent=1 // pred_region
      _
    $region45: #{tpu_custom_call.1} parent=1 // pred_fallthru
      _
    // Predicated region
    $region46: #{tpu_custom_call.1} parent=1 // pred_check
      _
    $region47: #{tpu_custom_call.1} parent=1 // pred_check_branch
      %82 = sbr.rel (0) target = $region49
    $region48: #{tpu_custom_call.1} parent=1 // pred_region
      %s84 = ssub.s32 16, 16
      %85 = vsyncadd [#allocation4], %s84
      %s87 = sshll.u32 %s11, 4
      %s88 = int_to_ptr.vmem [resolvable:$true] %s87
      %90 = dma.vmem_to_smem %s88, 16, [#allocation10], [#allocation4]
    $region49: #{tpu_custom_call.1} parent=1 // pred_fallthru
      _
    // Predicated region
    $region50: #{tpu_custom_call.1} parent=1 // pred_check
      _
    $region51: #{tpu_custom_call.1} parent=1 // pred_check_branch
      %92 = sbr.rel (0) target = $region53
    $region52: #{tpu_custom_call.1} parent=1 // pred_region
      %93 = dma.done [#allocation3], 128
    $region53: #{tpu_custom_call.1} parent=1 // pred_fallthru
      _
    // Predicated region
    $region54: #{tpu_custom_call.1} parent=1 // pred_check
      _
    $region55: #{tpu_custom_call.1} parent=1 // pred_check_branch
      %95 = sbr.rel (0) target = $region57
    $region56: #{tpu_custom_call.1} parent=1 // pred_region
      %96 = dma.done [#allocation6], 1024
    $region57: #{tpu_custom_call.1} parent=1 // pred_fallthru
      _
    // Predicated region
    $region58: #{tpu_custom_call.1} parent=1 // pred_check
      _
    $region59: #{tpu_custom_call.1} parent=1 // pred_check_branch
      %98 = sbr.rel (0) target = $region61
    $region60: #{tpu_custom_call.1} parent=1 // pred_region
      %99 = dma.done [#allocation6], 8192
    $region61: #{tpu_custom_call.1} parent=1 // pred_fallthru
      _
    // Predicated region
    $region62: #{tpu_custom_call.1} parent=1 // pred_check
      _
    $region63: #{tpu_custom_call.1} parent=1 // pred_check_branch
      %101 = sbr.rel (0) target = $region65
    $region64: #{tpu_custom_call.1} parent=1 // pred_region
      %102 = dma.done [#allocation9], 8192
    $region65: #{tpu_custom_call.1} parent=1 // pred_fallthru
      _
    // Predicated region
    $region66: #{tpu_custom_call.1} parent=1 // pred_check
      _
    $region67: #{tpu_custom_call.1} parent=1 // pred_check_branch
      %104 = sbr.rel (0) target = $region69
    $region68: #{tpu_custom_call.1} parent=1 // pred_region
      %105 = dma.done [#allocation4], 16
    $region69: #{tpu_custom_call.1} parent=1 // pred_fallthru
      _
    %106 = sfence
    %v107 = vld [vmem:[#allocation2] sm:$0xff]
    %v108 = vld [vmem:[%s1] sm:$0xff]
    %v109 = vld [vmem:[#allocation5] sm:$0xff]
    %v110 = vld [vmem:[#allocation5 + $0x8] sm:$0xff]
    %v111 = vld [vmem:[#allocation5 + $0x10] sm:$0xff]
    %v112 = vld [vmem:[#allocation5 + $0x18] sm:$0xff]
    %v113 = vld [vmem:[#allocation5 + $0x20] sm:$0xff]
    %v114 = vld [vmem:[#allocation5 + $0x28] sm:$0xff]
    %v115 = vld [vmem:[#allocation5 + $0x30] sm:$0xff]
    %v116 = vld [vmem:[#allocation5 + $0x38] sm:$0xff]
    %v117 = vld [vmem:[%s3] sm:$0xff]
    %v118 = vld [vmem:[%s3 + $0x8] sm:$0xff]
    %v121 = vcombine.high %v117, %v117
    %v122 = vcombine.high %v118, %v118
    %vm123 = vcmask 31744
    %v125 = vsel %vm123, %v108, 0
    %vm127 = vcmask 1043456
    %v128 = vsel %vm127, %v117, 0
    %v130 = vsel %vm127, %v121, 0
    %v132 = vsel %vm127, %v118, 0
    %v134 = vsel %vm127, %v122, 0
    %136 = vmatprep.subr.mxu0 %v130
    %137 = vmatpush1.msra.mxu0 %v128
    %138 = vmatprep.subr.mxu0 0.0
    %139 = vmatpush1.msra.mxu0 0.0
    %140 = vmatprep.subr.mxu0 0.0
    %141 = vmatpush1.msra.mxu0 0.0
    %142 = vmatprep.subr.mxu0 0.0
    %143 = vmatpush1.msra.mxu0 0.0
    %144 = vmatprep.subr.mxu0 0.0
    %145 = vmatpush1.msra.mxu0 0.0
    %146 = vmatprep.subr.mxu0 0.0
    %147 = vmatpush1.msra.mxu0 0.0
    %148 = vmatprep.subr.mxu0 0.0
    %149 = vmatpush1.msra.mxu0 0.0
    %150 = vmatprep.subr.mxu0 0.0
    %151 = vmatpush1.msra.mxu0 0.0
    %152 = vmatprep.subr.mxu0 0.0
    %153 = vmatpush1.msra.mxu0 0.0
    %154 = vmatprep.subr.mxu0 0.0
    %155 = vmatpush1.msra.mxu0 0.0
    %156 = vmatprep.subr.mxu0 0.0
    %157 = vmatpush1.msra.mxu0 0.0
    %158 = vmatprep.subr.mxu0 0.0
    %159 = vmatpush1.msra.mxu0 0.0
    %160 = vmatprep.subr.mxu0 0.0
    %161 = vmatpush1.msra.mxu0 0.0
    %162 = vmatprep.subr.mxu0 0.0
    %163 = vmatpush1.msra.mxu0 0.0
    %164 = vmatprep.subr.mxu0 0.0
    %165 = vmatpush1.msra.mxu0 0.0
    %166 = vmatprep.subr.mxu0 0.0
    %167 = vmatpush1.msra.mxu0 0.0
    %168 = vmatprep.subr.mxu0 0.0
    %169 = vmatpush1.msra.mxu0 0.0
    %170 = vmatprep.subr.mxu0 0.0
    %171 = vmatpush1.msra.mxu0 0.0
    %172 = vmatprep.subr.mxu0 0.0
    %173 = vmatpush1.msra.mxu0 0.0
    %174 = vmatprep.subr.mxu0 0.0
    %175 = vmatpush1.msra.mxu0 0.0
    %176 = vmatprep.subr.mxu0 0.0
    %177 = vmatpush1.msra.mxu0 0.0
    %178 = vmatprep.subr.mxu0 0.0
    %179 = vmatpush1.msra.mxu0 0.0
    %180 = vmatprep.subr.mxu0 0.0
    %181 = vmatpush1.msra.mxu0 0.0
    %182 = vmatprep.subr.mxu0 0.0
    %183 = vmatpush1.msra.mxu0 0.0
    %184 = vmatprep.subr.mxu0 0.0
    %185 = vmatpush1.msra.mxu0 0.0
    %186 = vmatprep.subr.mxu0 0.0
    %187 = vmatpush1.msra.mxu0 0.0
    %188 = vmatprep.subr.mxu0 0.0
    %189 = vmatpush1.msra.mxu0 0.0
    %190 = vmatprep.subr.mxu0 0.0
    %191 = vmatpush1.msra.mxu0 0.0
    %192 = vmatprep.subr.mxu0 0.0
    %193 = vmatpush1.msra.mxu0 0.0
    %194 = vmatprep.subr.mxu0 0.0
    %195 = vmatpush1.msra.mxu0 0.0
    %196 = vmatprep.subr.mxu0 0.0
    %197 = vmatpush1.msra.mxu0 0.0
    %198 = vmatprep.subr.mxu0 0.0
    %199 = vmatpush1.msra.mxu0 0.0
    %200 = vmatprep.mubr.f32.mxu0 0.0
    %201 = vmatmul.mubr.f32.gmra.mrb[0].mxu0 %v125
    %v202 = vpop.f32.mrb[0].mxu0
    %v203 = vadd.f32 0.0, %v202
    %v204 = vpop.f32.mrb[0].mxu0
    %v205 = vadd.f32 0.0, %v204
    %206 = vdwg.mxu0
    %207 = vmatprep.subr.mxu0 %v134
    %208 = vmatpush1.msra.mxu0 %v132
    %209 = vmatprep.subr.mxu0 0.0
    %210 = vmatpush1.msra.mxu0 0.0
    %211 = vmatprep.subr.mxu0 0.0
    %212 = vmatpush1.msra.mxu0 0.0
    %213 = vmatprep.subr.mxu0 0.0
    %214 = vmatpush1.msra.mxu0 0.0
    %215 = vmatprep.subr.mxu0 0.0
    %216 = vmatpush1.msra.mxu0 0.0
    %217 = vmatprep.subr.mxu0 0.0
    %218 = vmatpush1.msra.mxu0 0.0
    %219 = vmatprep.subr.mxu0 0.0
    %220 = vmatpush1.msra.mxu0 0.0
    %221 = vmatprep.subr.mxu0 0.0
    %222 = vmatpush1.msra.mxu0 0.0
    %223 = vmatprep.subr.mxu0 0.0
    %224 = vmatpush1.msra.mxu0 0.0
    %225 = vmatprep.subr.mxu0 0.0
    %226 = vmatpush1.msra.mxu0 0.0
    %227 = vmatprep.subr.mxu0 0.0
    %228 = vmatpush1.msra.mxu0 0.0
    %229 = vmatprep.subr.mxu0 0.0
    %230 = vmatpush1.msra.mxu0 0.0
    %231 = vmatprep.subr.mxu0 0.0
    %232 = vmatpush1.msra.mxu0 0.0
    %233 = vmatprep.subr.mxu0 0.0
    %234 = vmatpush1.msra.mxu0 0.0
    %235 = vmatprep.subr.mxu0 0.0
    %236 = vmatpush1.msra.mxu0 0.0
    %237 = vmatprep.subr.mxu0 0.0
    %238 = vmatpush1.msra.mxu0 0.0
    %239 = vmatprep.subr.mxu0 0.0
    %240 = vmatpush1.msra.mxu0 0.0
    %241 = vmatprep.subr.mxu0 0.0
    %242 = vmatpush1.msra.mxu0 0.0
    %243 = vmatprep.subr.mxu0 0.0
    %244 = vmatpush1.msra.mxu0 0.0
    %245 = vmatprep.subr.mxu0 0.0
    %246 = vmatpush1.msra.mxu0 0.0
    %247 = vmatprep.subr.mxu0 0.0
    %248 = vmatpush1.msra.mxu0 0.0
    %249 = vmatprep.subr.mxu0 0.0
    %250 = vmatpush1.msra.mxu0 0.0
    %251 = vmatprep.subr.mxu0 0.0
    %252 = vmatpush1.msra.mxu0 0.0
    %253 = vmatprep.subr.mxu0 0.0
    %254 = vmatpush1.msra.mxu0 0.0
    %255 = vmatprep.subr.mxu0 0.0
    %256 = vmatpush1.msra.mxu0 0.0
    %257 = vmatprep.subr.mxu0 0.0
    %258 = vmatpush1.msra.mxu0 0.0
    %259 = vmatprep.subr.mxu0 0.0
    %260 = vmatpush1.msra.mxu0 0.0
    %261 = vmatprep.subr.mxu0 0.0
    %262 = vmatpush1.msra.mxu0 0.0
    %263 = vmatprep.subr.mxu0 0.0
    %264 = vmatpush1.msra.mxu0 0.0
    %265 = vmatprep.subr.mxu0 0.0
    %266 = vmatpush1.msra.mxu0 0.0
    %267 = vmatprep.subr.mxu0 0.0
    %268 = vmatpush1.msra.mxu0 0.0
    %269 = vmatprep.subr.mxu0 0.0
    %270 = vmatpush1.msra.mxu0 0.0
    %271 = vmatprep.mubr.f32.mxu0 0.0
    %272 = vmatmul.mubr.f32.gmra.mrb[0].mxu0 %v125
    %v273 = vpop.f32.mrb[0].mxu0
    %v274 = vadd.f32 0.0, %v273
    %v275 = vpop.f32.mrb[0].mxu0
    %v276 = vadd.f32 0.0, %v275
    %277 = vdwg.mxu0
    %vm278 = vcmask 130048
    %v280 = vsel %vm278, %v107, 0
    %282 = vmatprep.subr.mxu0 %v110
    %283 = vmatpush1.msra.mxu0 %v109
    %284 = vmatprep.subr.mxu0 %v114
    %285 = vmatpush1.msra.mxu0 %v113
    %286 = vmatprep.subr.mxu0 0.0
    %287 = vmatpush1.msra.mxu0 0.0
    %288 = vmatprep.subr.mxu0 0.0
    %289 = vmatpush1.msra.mxu0 0.0
    %290 = vmatprep.subr.mxu0 0.0
    %291 = vmatpush1.msra.mxu0 0.0
    %292 = vmatprep.subr.mxu0 0.0
    %293 = vmatpush1.msra.mxu0 0.0
    %294 = vmatprep.subr.mxu0 0.0
    %295 = vmatpush1.msra.mxu0 0.0
    %296 = vmatprep.subr.mxu0 0.0
    %297 = vmatpush1.msra.mxu0 0.0
    %298 = vmatprep.subr.mxu0 0.0
    %299 = vmatpush1.msra.mxu0 0.0
    %300 = vmatprep.subr.mxu0 0.0
    %301 = vmatpush1.msra.mxu0 0.0
    %302 = vmatprep.subr.mxu0 0.0
    %303 = vmatpush1.msra.mxu0 0.0
    %304 = vmatprep.subr.mxu0 0.0
    %305 = vmatpush1.msra.mxu0 0.0
    %306 = vmatprep.subr.mxu0 0.0
    %307 = vmatpush1.msra.mxu0 0.0
    %308 = vmatprep.subr.mxu0 0.0
    %309 = vmatpush1.msra.mxu0 0.0
    %310 = vmatprep.subr.mxu0 0.0
    %311 = vmatpush1.msra.mxu0 0.0
    %312 = vmatprep.subr.mxu0 0.0
    %313 = vmatpush1.msra.mxu0 0.0
    %314 = vmatprep.subr.mxu0 0.0
    %315 = vmatpush1.msra.mxu0 0.0
    %316 = vmatprep.subr.mxu0 0.0
    %317 = vmatpush1.msra.mxu0 0.0
    %318 = vmatprep.subr.mxu0 0.0
    %319 = vmatpush1.msra.mxu0 0.0
    %320 = vmatprep.subr.mxu0 0.0
    %321 = vmatpush1.msra.mxu0 0.0
    %322 = vmatprep.subr.mxu0 0.0
    %323 = vmatpush1.msra.mxu0 0.0
    %324 = vmatprep.subr.mxu0 0.0
    %325 = vmatpush1.msra.mxu0 0.0
    %326 = vmatprep.subr.mxu0 0.0
    %327 = vmatpush1.msra.mxu0 0.0
    %328 = vmatprep.subr.mxu0 0.0
    %329 = vmatpush1.msra.mxu0 0.0
    %330 = vmatprep.subr.mxu0 0.0
    %331 = vmatpush1.msra.mxu0 0.0
    %332 = vmatprep.subr.mxu0 0.0
    %333 = vmatpush1.msra.mxu0 0.0
    %334 = vmatprep.subr.mxu0 0.0
    %335 = vmatpush1.msra.mxu0 0.0
    %336 = vmatprep.subr.mxu0 0.0
    %337 = vmatpush1.msra.mxu0 0.0
    %338 = vmatprep.subr.mxu0 0.0
    %339 = vmatpush1.msra.mxu0 0.0
    %340 = vmatprep.subr.mxu0 0.0
    %341 = vmatpush1.msra.mxu0 0.0
    %342 = vmatprep.subr.mxu0 0.0
    %343 = vmatpush1.msra.mxu0 0.0
    %344 = vmatprep.subr.mxu0 0.0
    %345 = vmatpush1.msra.mxu0 0.0
    %346 = vmatprep.mubr.f32.mxu0 0.0
    %347 = vmatmul.mubr.f32.gmra.mrb[0].mxu0 %v280
    %v348 = vpop.f32.mrb[0].mxu0
    %v349 = vadd.f32 %v203, %v348
    %v350 = vpop.f32.mrb[0].mxu0
    %v351 = vadd.f32 %v205, %v350
    %352 = vdwg.mxu0
    %353 = vmatprep.subr.mxu0 %v112
    %354 = vmatpush1.msra.mxu0 %v111
    %355 = vmatprep.subr.mxu0 %v116
    %356 = vmatpush1.msra.mxu0 %v115
    %357 = vmatprep.subr.mxu0 0.0
    %358 = vmatpush1.msra.mxu0 0.0
    %359 = vmatprep.subr.mxu0 0.0
    %360 = vmatpush1.msra.mxu0 0.0
    %361 = vmatprep.subr.mxu0 0.0
    %362 = vmatpush1.msra.mxu0 0.0
    %363 = vmatprep.subr.mxu0 0.0
    %364 = vmatpush1.msra.mxu0 0.0
    %365 = vmatprep.subr.mxu0 0.0
    %366 = vmatpush1.msra.mxu0 0.0
    %367 = vmatprep.subr.mxu0 0.0
    %368 = vmatpush1.msra.mxu0 0.0
    %369 = vmatprep.subr.mxu0 0.0
    %370 = vmatpush1.msra.mxu0 0.0
    %371 = vmatprep.subr.mxu0 0.0
    %372 = vmatpush1.msra.mxu0 0.0
    %373 = vmatprep.subr.mxu0 0.0
    %374 = vmatpush1.msra.mxu0 0.0
    %375 = vmatprep.subr.mxu0 0.0
    %376 = vmatpush1.msra.mxu0 0.0
    %377 = vmatprep.subr.mxu0 0.0
    %378 = vmatpush1.msra.mxu0 0.0
    %379 = vmatprep.subr.mxu0 0.0
    %380 = vmatpush1.msra.mxu0 0.0
    %381 = vmatprep.subr.mxu0 0.0
    %382 = vmatpush1.msra.mxu0 0.0
    %383 = vmatprep.subr.mxu0 0.0
    %384 = vmatpush1.msra.mxu0 0.0
    %385 = vmatprep.subr.mxu0 0.0
    %386 = vmatpush1.msra.mxu0 0.0
    %387 = vmatprep.subr.mxu0 0.0
    %388 = vmatpush1.msra.mxu0 0.0
    %389 = vmatprep.subr.mxu0 0.0
    %390 = vmatpush1.msra.mxu0 0.0
    %391 = vmatprep.subr.mxu0 0.0
    %392 = vmatpush1.msra.mxu0 0.0
    %393 = vmatprep.subr.mxu0 0.0
    %394 = vmatpush1.msra.mxu0 0.0
    %395 = vmatprep.subr.mxu0 0.0
    %396 = vmatpush1.msra.mxu0 0.0
    %397 = vmatprep.subr.mxu0 0.0
    %398 = vmatpush1.msra.mxu0 0.0
    %399 = vmatprep.subr.mxu0 0.0
    %400 = vmatpush1.msra.mxu0 0.0
    %401 = vmatprep.subr.mxu0 0.0
    %402 = vmatpush1.msra.mxu0 0.0
    %403 = vmatprep.subr.mxu0 0.0
    %404 = vmatpush1.msra.mxu0 0.0
    %405 = vmatprep.subr.mxu0 0.0
    %406 = vmatpush1.msra.mxu0 0.0
    %407 = vmatprep.subr.mxu0 0.0
    %408 = vmatpush1.msra.mxu0 0.0
    %409 = vmatprep.subr.mxu0 0.0
    %410 = vmatpush1.msra.mxu0 0.0
    %411 = vmatprep.subr.mxu0 0.0
    %412 = vmatpush1.msra.mxu0 0.0
    %413 = vmatprep.subr.mxu0 0.0
    %414 = vmatpush1.msra.mxu0 0.0
    %415 = vmatprep.subr.mxu0 0.0
    %416 = vmatpush1.msra.mxu0 0.0
    %417 = vmatprep.mubr.f32.mxu0 0.0
    %418 = vmatmul.mubr.f32.gmra.mrb[0].mxu0 %v280
    %v419 = vpop.f32.mrb[0].mxu0
    %v420 = vadd.f32 %v274, %v419
    %v421 = vpop.f32.mrb[0].mxu0
    %v422 = vadd.f32 %v276, %v421
    %423 = vdwg.mxu0
    %v424 = vld [vmem:[%s4] sm:$0xf]
    %v426 = vlaneseq
    %v427 = vshrl.u32 %v426, 7
    %v428 = vsub.s32 0, %v427
    %v429 = vrot.slane %v424, %v428
    %v430 = vlaneseq
    %v431 = vshrl.u32 %v430, 7
    %v432 = vsub.s32 1, %v431
    %v433 = vrot.slane %v424, %v432
    %v434 = vlaneseq
    %v435 = vshrl.u32 %v434, 7
    %v436 = vsub.s32 2, %v435
    %v437 = vrot.slane %v424, %v436
    %v438 = vlaneseq
    %v439 = vshrl.u32 %v438, 7
    %v440 = vsub.s32 3, %v439
    %v441 = vrot.slane %v424, %v440
    %v446 = vadd.f32 %v349, %v429
    %v447 = vadd.f32 %v351, %v433
    %v448 = vadd.f32 %v420, %v437
    %v449 = vadd.f32 %v422, %v441
    %v450 = vmax.f32 %v446, 0.0
    %v451 = vmax.f32 %v447, 0.0
    %v452 = vmax.f32 %v448, 0.0
    %v453 = vmax.f32 %v449, 0.0
    %v454 = vld [vmem:[#allocation7] sm:$0xff]
    %v455 = vld [vmem:[#allocation7 + $0x8] sm:$0xff]
    %v456 = vld [vmem:[#allocation7 + $0x10] sm:$0xff]
    %v457 = vld [vmem:[#allocation7 + $0x18] sm:$0xff]
    %v458 = vld [vmem:[#allocation7 + $0x20] sm:$0xff]
    %v459 = vld [vmem:[#allocation7 + $0x28] sm:$0xff]
    %v460 = vld [vmem:[#allocation7 + $0x30] sm:$0xff]
    %v461 = vld [vmem:[#allocation7 + $0x38] sm:$0xff]
    %v462 = vld [vmem:[#allocation7 + $0x40] sm:$0xff]
    %v463 = vld [vmem:[#allocation7 + $0x48] sm:$0xff]
    %v464 = vld [vmem:[#allocation7 + $0x50] sm:$0xff]
    %v465 = vld [vmem:[#allocation7 + $0x58] sm:$0xff]
    %v466 = vld [vmem:[#allocation7 + $0x60] sm:$0xff]
    %v467 = vld [vmem:[#allocation7 + $0x68] sm:$0xff]
    %v468 = vld [vmem:[#allocation7 + $0x70] sm:$0xff]
    %v469 = vld [vmem:[#allocation7 + $0x78] sm:$0xff]
    %v470 = vld [vmem:[#allocation7 + $0x80] sm:$0xff]
    %v471 = vld [vmem:[#allocation7 + $0x88] sm:$0xff]
    %v472 = vld [vmem:[#allocation7 + $0x90] sm:$0xff]
    %v473 = vld [vmem:[#allocation7 + $0x98] sm:$0xff]
    %v474 = vld [vmem:[#allocation7 + $0xa0] sm:$0xff]
    %v475 = vld [vmem:[#allocation7 + $0xa8] sm:$0xff]
    %v476 = vld [vmem:[#allocation7 + $0xb0] sm:$0xff]
    %v477 = vld [vmem:[#allocation7 + $0xb8] sm:$0xff]
    %v478 = vld [vmem:[#allocation7 + $0xc0] sm:$0xff]
    %v479 = vld [vmem:[#allocation7 + $0xc8] sm:$0xff]
    %v480 = vld [vmem:[#allocation7 + $0xd0] sm:$0xff]
    %v481 = vld [vmem:[#allocation7 + $0xd8] sm:$0xff]
    %v482 = vld [vmem:[#allocation7 + $0xe0] sm:$0xff]
    %v483 = vld [vmem:[#allocation7 + $0xe8] sm:$0xff]
    %v484 = vld [vmem:[#allocation7 + $0xf0] sm:$0xff]
    %v485 = vld [vmem:[#allocation7 + $0xf8] sm:$0xff]
    %v486 = vld [vmem:[#allocation7 + $0x100] sm:$0xff]
    %v487 = vld [vmem:[#allocation7 + $0x108] sm:$0xff]
    %v488 = vld [vmem:[#allocation7 + $0x110] sm:$0xff]
    %v489 = vld [vmem:[#allocation7 + $0x118] sm:$0xff]
    %v490 = vld [vmem:[#allocation7 + $0x120] sm:$0xff]
    %v491 = vld [vmem:[#allocation7 + $0x128] sm:$0xff]
    %v492 = vld [vmem:[#allocation7 + $0x130] sm:$0xff]
    %v493 = vld [vmem:[#allocation7 + $0x138] sm:$0xff]
    %v494 = vld [vmem:[#allocation7 + $0x140] sm:$0xff]
    %v495 = vld [vmem:[#allocation7 + $0x148] sm:$0xff]
    %v496 = vld [vmem:[#allocation7 + $0x150] sm:$0xff]
    %v497 = vld [vmem:[#allocation7 + $0x158] sm:$0xff]
    %v498 = vld [vmem:[#allocation7 + $0x160] sm:$0xff]
    %v499 = vld [vmem:[#allocation7 + $0x168] sm:$0xff]
    %v500 = vld [vmem:[#allocation7 + $0x170] sm:$0xff]
    %v501 = vld [vmem:[#allocation7 + $0x178] sm:$0xff]
    %v502 = vld [vmem:[#allocation7 + $0x180] sm:$0xff]
    %v503 = vld [vmem:[#allocation7 + $0x188] sm:$0xff]
    %v504 = vld [vmem:[#allocation7 + $0x190] sm:$0xff]
    %v505 = vld [vmem:[#allocation7 + $0x198] sm:$0xff]
    %v506 = vld [vmem:[#allocation7 + $0x1a0] sm:$0xff]
    %v507 = vld [vmem:[#allocation7 + $0x1a8] sm:$0xff]
    %v508 = vld [vmem:[#allocation7 + $0x1b0] sm:$0xff]
    %v509 = vld [vmem:[#allocation7 + $0x1b8] sm:$0xff]
    %v510 = vld [vmem:[#allocation7 + $0x1c0] sm:$0xff]
    %v511 = vld [vmem:[#allocation7 + $0x1c8] sm:$0xff]
    %v512 = vld [vmem:[#allocation7 + $0x1d0] sm:$0xff]
    %v513 = vld [vmem:[#allocation7 + $0x1d8] sm:$0xff]
    %v514 = vld [vmem:[#allocation7 + $0x1e0] sm:$0xff]
    %v515 = vld [vmem:[#allocation7 + $0x1e8] sm:$0xff]
    %v516 = vld [vmem:[#allocation7 + $0x1f0] sm:$0xff]
    %v517 = vld [vmem:[#allocation7 + $0x1f8] sm:$0xff]
    %v518 = vld [vmem:[%s6] sm:$0x3]
    %v520 = vlaneseq
    %v521 = vshrl.u32 %v520, 7
    %v522 = vsub.s32 0, %v521
    %v523 = vrot.slane %v518, %v522
    %v524 = vlaneseq
    %v525 = vshrl.u32 %v524, 7
    %v526 = vsub.s32 1, %v525
    %v527 = vrot.slane %v518, %v526
    %530 = vmatprep.subr.mxu0 %v455
    %531 = vmatpush1.msra.mxu0 %v454
    %532 = vmatprep.subr.mxu0 %v457
    %533 = vmatpush1.msra.mxu0 %v456
    %534 = vmatprep.subr.mxu0 %v459
    %535 = vmatpush1.msra.mxu0 %v458
    %536 = vmatprep.subr.mxu0 %v461
    %537 = vmatpush1.msra.mxu0 %v460
    %538 = vmatprep.subr.mxu0 %v463
    %539 = vmatpush1.msra.mxu0 %v462
    %540 = vmatprep.subr.mxu0 %v465
    %541 = vmatpush1.msra.mxu0 %v464
    %542 = vmatprep.subr.mxu0 %v467
    %543 = vmatpush1.msra.mxu0 %v466
    %544 = vmatprep.subr.mxu0 %v469
    %545 = vmatpush1.msra.mxu0 %v468
    %546 = vmatprep.subr.mxu0 %v471
    %547 = vmatpush1.msra.mxu0 %v470
    %548 = vmatprep.subr.mxu0 %v473
    %549 = vmatpush1.msra.mxu0 %v472
    %550 = vmatprep.subr.mxu0 %v475
    %551 = vmatpush1.msra.mxu0 %v474
    %552 = vmatprep.subr.mxu0 %v477
    %553 = vmatpush1.msra.mxu0 %v476
    %554 = vmatprep.subr.mxu0 %v479
    %555 = vmatpush1.msra.mxu0 %v478
    %556 = vmatprep.subr.mxu0 %v481
    %557 = vmatpush1.msra.mxu0 %v480
    %558 = vmatprep.subr.mxu0 %v483
    %559 = vmatpush1.msra.mxu0 %v482
    %560 = vmatprep.subr.mxu0 %v485
    %561 = vmatpush1.msra.mxu0 %v484
    %562 = vmatprep.subr.mxu0 %v487
    %563 = vmatpush1.msra.mxu0 %v486
    %564 = vmatprep.subr.mxu0 %v489
    %565 = vmatpush1.msra.mxu0 %v488
    %566 = vmatprep.subr.mxu0 %v491
    %567 = vmatpush1.msra.mxu0 %v490
    %568 = vmatprep.subr.mxu0 %v493
    %569 = vmatpush1.msra.mxu0 %v492
    %570 = vmatprep.subr.mxu0 %v495
    %571 = vmatpush1.msra.mxu0 %v494
    %572 = vmatprep.subr.mxu0 %v497
    %573 = vmatpush1.msra.mxu0 %v496
    %574 = vmatprep.subr.mxu0 %v499
    %575 = vmatpush1.msra.mxu0 %v498
    %576 = vmatprep.subr.mxu0 %v501
    %577 = vmatpush1.msra.mxu0 %v500
    %578 = vmatprep.subr.mxu0 %v503
    %579 = vmatpush1.msra.mxu0 %v502
    %580 = vmatprep.subr.mxu0 %v505
    %581 = vmatpush1.msra.mxu0 %v504
    %582 = vmatprep.subr.mxu0 %v507
    %583 = vmatpush1.msra.mxu0 %v506
    %584 = vmatprep.subr.mxu0 %v509
    %585 = vmatpush1.msra.mxu0 %v508
    %586 = vmatprep.subr.mxu0 %v511
    %587 = vmatpush1.msra.mxu0 %v510
    %588 = vmatprep.subr.mxu0 %v513
    %589 = vmatpush1.msra.mxu0 %v512
    %590 = vmatprep.subr.mxu0 %v515
    %591 = vmatpush1.msra.mxu0 %v514
    %592 = vmatprep.subr.mxu0 %v517
    %593 = vmatpush1.msra.mxu0 %v516
    %594 = vmatprep.mubr.f32.mxu0 %v451
    %595 = vmatmul.mubr.f32.gmra.mrb[0].mxu0 %v450
    %v596 = vpop.f32.mrb[0].mxu0
    %v597 = vadd.f32 %v523, %v596
    %v598 = vpop.f32.mrb[0].mxu0
    %v599 = vadd.f32 %v527, %v598
    %600 = vdwg.mxu0
    %v601 = vmax.f32 %v597, 0.0
    %v602 = vmax.f32 %v599, 0.0
    %v603 = vld [vmem:[#allocation8] sm:$0xff]
    %v604 = vld [vmem:[#allocation8 + $0x8] sm:$0xff]
    %v605 = vld [vmem:[#allocation8 + $0x10] sm:$0xff]
    %v606 = vld [vmem:[#allocation8 + $0x18] sm:$0xff]
    %v607 = vld [vmem:[#allocation8 + $0x20] sm:$0xff]
    %v608 = vld [vmem:[#allocation8 + $0x28] sm:$0xff]
    %v609 = vld [vmem:[#allocation8 + $0x30] sm:$0xff]
    %v610 = vld [vmem:[#allocation8 + $0x38] sm:$0xff]
    %v611 = vld [vmem:[#allocation8 + $0x40] sm:$0xff]
    %v612 = vld [vmem:[#allocation8 + $0x48] sm:$0xff]
    %v613 = vld [vmem:[#allocation8 + $0x50] sm:$0xff]
    %v614 = vld [vmem:[#allocation8 + $0x58] sm:$0xff]
    %v615 = vld [vmem:[#allocation8 + $0x60] sm:$0xff]
    %v616 = vld [vmem:[#allocation8 + $0x68] sm:$0xff]
    %v617 = vld [vmem:[#allocation8 + $0x70] sm:$0xff]
    %v618 = vld [vmem:[#allocation8 + $0x78] sm:$0xff]
    %v619 = vld [vmem:[#allocation8 + $0x80] sm:$0xff]
    %v620 = vld [vmem:[#allocation8 + $0x88] sm:$0xff]
    %v621 = vld [vmem:[#allocation8 + $0x90] sm:$0xff]
    %v622 = vld [vmem:[#allocation8 + $0x98] sm:$0xff]
    %v623 = vld [vmem:[#allocation8 + $0xa0] sm:$0xff]
    %v624 = vld [vmem:[#allocation8 + $0xa8] sm:$0xff]
    %v625 = vld [vmem:[#allocation8 + $0xb0] sm:$0xff]
    %v626 = vld [vmem:[#allocation8 + $0xb8] sm:$0xff]
    %v627 = vld [vmem:[#allocation8 + $0xc0] sm:$0xff]
    %v628 = vld [vmem:[#allocation8 + $0xc8] sm:$0xff]
    %v629 = vld [vmem:[#allocation8 + $0xd0] sm:$0xff]
    %v630 = vld [vmem:[#allocation8 + $0xd8] sm:$0xff]
    %v631 = vld [vmem:[#allocation8 + $0xe0] sm:$0xff]
    %v632 = vld [vmem:[#allocation8 + $0xe8] sm:$0xff]
    %v633 = vld [vmem:[#allocation8 + $0xf0] sm:$0xff]
    %v634 = vld [vmem:[#allocation8 + $0xf8] sm:$0xff]
    %v635 = vld [vmem:[#allocation8 + $0x100] sm:$0xff]
    %v636 = vld [vmem:[#allocation8 + $0x108] sm:$0xff]
    %v637 = vld [vmem:[#allocation8 + $0x110] sm:$0xff]
    %v638 = vld [vmem:[#allocation8 + $0x118] sm:$0xff]
    %v639 = vld [vmem:[#allocation8 + $0x120] sm:$0xff]
    %v640 = vld [vmem:[#allocation8 + $0x128] sm:$0xff]
    %v641 = vld [vmem:[#allocation8 + $0x130] sm:$0xff]
    %v642 = vld [vmem:[#allocation8 + $0x138] sm:$0xff]
    %v643 = vld [vmem:[#allocation8 + $0x140] sm:$0xff]
    %v644 = vld [vmem:[#allocation8 + $0x148] sm:$0xff]
    %v645 = vld [vmem:[#allocation8 + $0x150] sm:$0xff]
    %v646 = vld [vmem:[#allocation8 + $0x158] sm:$0xff]
    %v647 = vld [vmem:[#allocation8 + $0x160] sm:$0xff]
    %v648 = vld [vmem:[#allocation8 + $0x168] sm:$0xff]
    %v649 = vld [vmem:[#allocation8 + $0x170] sm:$0xff]
    %v650 = vld [vmem:[#allocation8 + $0x178] sm:$0xff]
    %v651 = vld [vmem:[#allocation8 + $0x180] sm:$0xff]
    %v652 = vld [vmem:[#allocation8 + $0x188] sm:$0xff]
    %v653 = vld [vmem:[#allocation8 + $0x190] sm:$0xff]
    %v654 = vld [vmem:[#allocation8 + $0x198] sm:$0xff]
    %v655 = vld [vmem:[#allocation8 + $0x1a0] sm:$0xff]
    %v656 = vld [vmem:[#allocation8 + $0x1a8] sm:$0xff]
    %v657 = vld [vmem:[#allocation8 + $0x1b0] sm:$0xff]
    %v658 = vld [vmem:[#allocation8 + $0x1b8] sm:$0xff]
    %v659 = vld [vmem:[#allocation8 + $0x1c0] sm:$0xff]
    %v660 = vld [vmem:[#allocation8 + $0x1c8] sm:$0xff]
    %v661 = vld [vmem:[#allocation8 + $0x1d0] sm:$0xff]
    %v662 = vld [vmem:[#allocation8 + $0x1d8] sm:$0xff]
    %v663 = vld [vmem:[#allocation8 + $0x1e0] sm:$0xff]
    %v664 = vld [vmem:[#allocation8 + $0x1e8] sm:$0xff]
    %v665 = vld [vmem:[#allocation8 + $0x1f0] sm:$0xff]
    %v666 = vld [vmem:[#allocation8 + $0x1f8] sm:$0xff]
    %v667 = vld [vmem:[%s8] sm:$0x3]
    %v669 = vlaneseq
    %v670 = vshrl.u32 %v669, 7
    %v671 = vsub.s32 0, %v670
    %v672 = vrot.slane %v667, %v671
    %v673 = vlaneseq
    %v674 = vshrl.u32 %v673, 7
    %v675 = vsub.s32 1, %v674
    %v676 = vrot.slane %v667, %v675
    %679 = vmatprep.subr.mxu0 %v604
    %680 = vmatpush1.msra.mxu0 %v603
    %681 = vmatprep.subr.mxu0 %v606
    %682 = vmatpush1.msra.mxu0 %v605
    %683 = vmatprep.subr.mxu0 %v608
    %684 = vmatpush1.msra.mxu0 %v607
    %685 = vmatprep.subr.mxu0 %v610
    %686 = vmatpush1.msra.mxu0 %v609
    %687 = vmatprep.subr.mxu0 %v612
    %688 = vmatpush1.msra.mxu0 %v611
    %689 = vmatprep.subr.mxu0 %v614
    %690 = vmatpush1.msra.mxu0 %v613
    %691 = vmatprep.subr.mxu0 %v616
    %692 = vmatpush1.msra.mxu0 %v615
    %693 = vmatprep.subr.mxu0 %v618
    %694 = vmatpush1.msra.mxu0 %v617
    %695 = vmatprep.subr.mxu0 %v620
    %696 = vmatpush1.msra.mxu0 %v619
    %697 = vmatprep.subr.mxu0 %v622
    %698 = vmatpush1.msra.mxu0 %v621
    %699 = vmatprep.subr.mxu0 %v624
    %700 = vmatpush1.msra.mxu0 %v623
    %701 = vmatprep.subr.mxu0 %v626
    %702 = vmatpush1.msra.mxu0 %v625
    %703 = vmatprep.subr.mxu0 %v628
    %704 = vmatpush1.msra.mxu0 %v627
    %705 = vmatprep.subr.mxu0 %v630
    %706 = vmatpush1.msra.mxu0 %v629
    %707 = vmatprep.subr.mxu0 %v632
    %708 = vmatpush1.msra.mxu0 %v631
    %709 = vmatprep.subr.mxu0 %v634
    %710 = vmatpush1.msra.mxu0 %v633
    %711 = vmatprep.subr.mxu0 %v636
    %712 = vmatpush1.msra.mxu0 %v635
    %713 = vmatprep.subr.mxu0 %v638
    %714 = vmatpush1.msra.mxu0 %v637
    %715 = vmatprep.subr.mxu0 %v640
    %716 = vmatpush1.msra.mxu0 %v639
    %717 = vmatprep.subr.mxu0 %v642
    %718 = vmatpush1.msra.mxu0 %v641
    %719 = vmatprep.subr.mxu0 %v644
    %720 = vmatpush1.msra.mxu0 %v643
    %721 = vmatprep.subr.mxu0 %v646
    %722 = vmatpush1.msra.mxu0 %v645
    %723 = vmatprep.subr.mxu0 %v648
    %724 = vmatpush1.msra.mxu0 %v647
    %725 = vmatprep.subr.mxu0 %v650
    %726 = vmatpush1.msra.mxu0 %v649
    %727 = vmatprep.subr.mxu0 %v652
    %728 = vmatpush1.msra.mxu0 %v651
    %729 = vmatprep.subr.mxu0 %v654
    %730 = vmatpush1.msra.mxu0 %v653
    %731 = vmatprep.subr.mxu0 %v656
    %732 = vmatpush1.msra.mxu0 %v655
    %733 = vmatprep.subr.mxu0 %v658
    %734 = vmatpush1.msra.mxu0 %v657
    %735 = vmatprep.subr.mxu0 %v660
    %736 = vmatpush1.msra.mxu0 %v659
    %737 = vmatprep.subr.mxu0 %v662
    %738 = vmatpush1.msra.mxu0 %v661
    %739 = vmatprep.subr.mxu0 %v664
    %740 = vmatpush1.msra.mxu0 %v663
    %741 = vmatprep.subr.mxu0 %v666
    %742 = vmatpush1.msra.mxu0 %v665
    %743 = vmatprep.mubr.f32.mxu0 %v453
    %744 = vmatmul.mubr.f32.gmra.mrb[0].mxu0 %v452
    %v745 = vpop.f32.mrb[0].mxu0
    %v746 = vadd.f32 %v672, %v745
    %v747 = vpop.f32.mrb[0].mxu0
    %v748 = vadd.f32 %v676, %v747
    %749 = vdwg.mxu0
    %v750 = vmax.f32 %v746, 0.0
    %v751 = vmax.f32 %v748, 0.0
    %v752 = vld [vmem:[%s9] sm:$0x3]
    %v754 = vlaneseq
    %v755 = vshrl.u32 %v754, 7
    %v756 = vsub.s32 0, %v755
    %v757 = vrot.slane %v752, %v756
    %v758 = vlaneseq
    %v759 = vshrl.u32 %v758, 7
    %v760 = vsub.s32 1, %v759
    %v761 = vrot.slane %v752, %v760
    %v764 = vmul.f32 %v601, %v757
    %v765 = vmul.f32 %v602, %v761
    %v766 = vadd.f32 %v764, %v765
    %767 = vadd.xlane.f32.xlu0 %v766
    %v768 = vpop.xlane.xlu0 %767
    %s769 = sld [smem:[#allocation10]]
    %v770 = vstv %s769
    %v771 = vadd.f32 %v768, %v770
    %v772 = vld [vmem:[%s10] sm:$0x3]
    %v774 = vlaneseq
    %v775 = vshrl.u32 %v774, 7
    %v776 = vsub.s32 0, %v775
    %v777 = vrot.slane %v772, %v776
    %v778 = vlaneseq
    %v779 = vshrl.u32 %v778, 7
    %v780 = vsub.s32 1, %v779
    %v781 = vrot.slane %v772, %v780
    %v784 = vmul.f32 %v750, %v777
    %v785 = vmul.f32 %v751, %v781
    %v786 = vadd.f32 %v784, %v785
    %787 = vadd.xlane.f32.xlu0 %v786
    %v788 = vpop.xlane.xlu0 %787
    %s789 = sld [smem:[#allocation10 + $0x1]]
    %v790 = vstv %s789
    %v791 = vadd.f32 %v788, %v790
    %vm792 = vcmask 7168
    %v793 = vsel %vm792, %v771, %v791
    %vm794 = vcmask 15360
    %795 = vst.msk [vmem:[%s12] sm:$0xff] %vm794, %v793
    // Predicated region
    $region70: #{tpu_custom_call.1} parent=1 // pred_check
      _
    $region71: #{tpu_custom_call.1} parent=1 // pred_check_branch
      %797 = sbr.rel (0) target = $region73
    $region72: #{tpu_custom_call.1} parent=1 // pred_region
      _
    $region73: #{tpu_custom_call.1} parent=1 // pred_fallthru
      _
    // Predicated region
    $region74: #{tpu_custom_call.1} parent=1 // pred_check
      _
    $region75: #{tpu_custom_call.1} parent=1 // pred_check_branch
      %799 = sbr.rel (0) target = $region77
    $region76: #{tpu_custom_call.1} parent=1 // pred_region
      _
    $region77: #{tpu_custom_call.1} parent=1 // pred_fallthru
      _
    %800 = vsyncpa [#allocation3], 1
    %801 = vsyncpa [#allocation6], 1
    %802 = vsyncpa [#allocation9], 1
    %803 = vsyncpa [#allocation4], 1

</llo_original>
